<compile_context>
chip_gen: v6e
topology: v6e:2x2x1
jax: 0.10.0
libtpu: 0.0.40
codegen_flags: <defaults>
</compile_context>

<pallas_src>
import jax
import jax.numpy as jnp
from jax.experimental import pallas as pl
from jax.experimental.pallas import tpu as pltpu

LANE = 128           # lane width (last-dim padding target)
SUBLANE_BF16 = 16    # bf16 sublane pack (batch-tile granularity)


def _round_up(n, m):
    return ((n + m - 1) // m) * m


def _pad_to(a, shape):
    pads = [(0, t - s) for s, t in zip(a.shape, shape)]
    if any(p[1] for p in pads):
        return jnp.pad(a, pads)
    return a


def _dqn_kernel(x_ref, w1_ref, b1_ref, w2_ref, b2_ref, w3_ref, b3_ref, o_ref):
    # x / weights are bf16 (MXU-native); accumulation, bias add and ReLU are f32.
    x = x_ref[...]

    # fc1 + ReLU
    h1 = jnp.dot(x, w1_ref[...], preferred_element_type=jnp.float32) + b1_ref[...]
    h1 = jnp.maximum(h1, 0.0).astype(jnp.bfloat16)

    # fc2 + ReLU
    h2 = jnp.dot(h1, w2_ref[...], preferred_element_type=jnp.float32) + b2_ref[...]
    h2 = jnp.maximum(h2, 0.0).astype(jnp.bfloat16)

    # fc3 (no activation)
    out = jnp.dot(h2, w3_ref[...], preferred_element_type=jnp.float32) + b3_ref[...]
    o_ref[...] = out.astype(o_ref.dtype)


def init_dqn_params(key, state_dimension, action_dimension, hidden_dimension=256):
    """PyTorch-default-style init. Weights stored transposed: shape (in, out)."""
    def linear(k, fan_in, fan_out):
        kw, kb = jax.random.split(k)
        bound = 1.0 / jnp.sqrt(fan_in)
        w = jax.random.uniform(kw, (fan_in, fan_out), jnp.float32, -bound, bound)
        b = jax.random.uniform(kb, (1, fan_out), jnp.float32, -bound, bound)
        return w, b

    k1, k2, k3 = jax.random.split(key, 3)
    w1, b1 = linear(k1, state_dimension, hidden_dimension)
    w2, b2 = linear(k2, hidden_dimension, hidden_dimension)
    w3, b3 = linear(k3, hidden_dimension, action_dimension)
    return {"w1": w1, "b1": b1, "w2": w2, "b2": b2, "w3": w3, "b3": b3}


def prepare_dqn_params(params, weight_dtype=jnp.bfloat16):
    """Pad feature dims to 128 and cast weights to bf16 ONCE.

    Call this at init and again after every parameter update — NOT per forward —
    so the per-call wrapper emits no pad/convert ops over the weights.
    Zero padding is exact: padded hidden units get bias 0 -> ReLU(0)=0 and the
    corresponding weight rows/cols are 0.
    """
    w1, b1 = params["w1"], params["b1"]
    w2, b2 = params["w2"], params["b2"]
    w3, b3 = params["w3"], params["b3"]

    S, H = w1.shape
    A = w3.shape[1]
    H_p = _round_up(H, LANE)   # hidden padded for lane-dense matmuls
    A_p = _round_up(A, LANE)   # output padded for unmasked stores
    # S (input features) intentionally NOT padded: block dim == array dim is legal
    # and multiplying zero columns would be wasted MXU/DMA work.

    return {
        "w1": _pad_to(w1, (S, H_p)).astype(weight_dtype),
        "b1": _pad_to(b1, (1, H_p)).astype(jnp.float32),
        "w2": _pad_to(w2, (H_p, H_p)).astype(weight_dtype),
        "b2": _pad_to(b2, (1, H_p)).astype(jnp.float32),
        "w3": _pad_to(w3, (H_p, A_p)).astype(weight_dtype),
        "b3": _pad_to(b3, (1, A_p)).astype(jnp.float32),
    }


def dqn_forward(x, padded_params, action_dimension, *, tile_b=256):
    """x: (B, state_dim) f32. padded_params: output of prepare_dqn_params()."""
    w1, b1 = padded_params["w1"], padded_params["b1"]
    w2, b2 = padded_params["w2"], padded_params["b2"]
    w3, b3 = padded_params["w3"], padded_params["b3"]

    B, S = x.shape
    assert S == w1.shape[0], (S, w1.shape)
    H_p = w1.shape[1]
    A_p = w3.shape[1]
    A = action_dimension

    # Batch tile: multiple of 16 (bf16 sublane pack). When the batch is big enough,
    # keep >= 2 grid steps so dimension_semantics=('parallel',) can shard across
    # the two TensorCores on v7x.
    if B >= 2 * SUBLANE_BF16:
        tile_b = min(tile_b, _round_up(pl.cdiv(B, 2), SUBLANE_BF16))
    else:
        tile_b = min(tile_b, _round_up(B, SUBLANE_BF16))
    tile_b = max(SUBLANE_BF16, (tile_b // SUBLANE_BF16) * SUBLANE_BF16)
    B_p = _round_up(B, tile_b)

    # Only the activations are touched per call (tiny compared to the weights).
    x_p = _pad_to(x, (B_p, S)).astype(jnp.bfloat16)

    grid = (B_p // tile_b,)

    # --- VMEM budgeting -------------------------------------------------------
    nbytes = lambda a: a.size * a.dtype.itemsize
    weight_bytes = sum(nbytes(a) for a in (w1, b1, w2, b2, w3, b3))
    tile_bytes = tile_b * S * 2 + tile_b * A_p * 4            # bf16 x tile + f32 out tile
    # Resident weights never change block index; for big models single-buffer them
    # (a second buffer is pure waste) so they still fit v7x's 64 MiB VMEM.
    single_buffer_weights = weight_bytes > (8 << 20)
    w_bufs = 1 if single_buffer_weights else 2
    needed = (w_bufs * weight_bytes            # resident weights/biases
              + 2 * tile_bytes                 # double-buffered x/out tiles
              + 4 * tile_b * H_p * 2)          # f32 intermediates inside the body
    vmem_limit = int(min(110 << 20, max(2 * needed, 8 << 20)))

    def resident(shape):
        # Weights/biases use a constant index_map -> loaded once, resident across steps.
        if single_buffer_weights:
            return pl.BlockSpec(shape, lambda i: (0, 0), pipeline_mode=pl.Buffered(1))
        return pl.BlockSpec(shape, lambda i: (0, 0))

    flops = 2 * B_p * (S * H_p + H_p * H_p + H_p * A_p)
    bytes_accessed = x_p.size * 2 + weight_bytes + B_p * A_p * 4

    out_p = pl.pallas_call(
        _dqn_kernel,
        out_shape=jax.ShapeDtypeStruct((B_p, A_p), jnp.float32),
        grid=grid,
        in_specs=[
            pl.BlockSpec((tile_b, S), lambda i: (i, 0)),   # x: tiled over batch, full S
            resident((S, H_p)), resident((1, H_p)),        # fc1
            resident((H_p, H_p)), resident((1, H_p)),      # fc2
            resident((H_p, A_p)), resident((1, A_p)),      # fc3
        ],
        out_specs=pl.BlockSpec((tile_b, A_p), lambda i: (i, 0)),
        compiler_params=pltpu.CompilerParams(
            dimension_semantics=("parallel",),             # megacore shard on v7x
            vmem_limit_bytes=vmem_limit,
        ),
        cost_estimate=pl.CostEstimate(
            flops=flops, bytes_accessed=bytes_accessed, transcendentals=0),
    )(x_p, w1, b1, w2, b2, w3, b3)

    return out_p[:B, :A]


def dqn_reference(x, p):
    """Pure-JAX reference with the same bf16-input / f32-accumulate recipe as the kernel."""
    xb = x.astype(jnp.bfloat16)
    w1 = p["w1"].astype(jnp.bfloat16)
    w2 = p["w2"].astype(jnp.bfloat16)
    w3 = p["w3"].astype(jnp.bfloat16)
    h1 = jnp.maximum(jnp.dot(xb, w1, preferred_element_type=jnp.float32) + p["b1"], 0.0)
    h1 = h1.astype(jnp.bfloat16)
    h2 = jnp.maximum(jnp.dot(h1, w2, preferred_element_type=jnp.float32) + p["b2"], 0.0)
    h2 = h2.astype(jnp.bfloat16)
    return jnp.dot(h2, w3, preferred_element_type=jnp.float32) + p["b3"]


# TODO(synk): save_model / load_model are file I/O (torch.save/load) and have no
# Pallas equivalent; parameters are plain JAX arrays in the `params` dict instead.

if __name__ == "__main__":
    # Small shapes consistent with a checkers DQN: flat state vector, small action space.
    batch = 16
    state_dim = 32
    action_dim = 8
    hidden_dim = 128

    key = jax.random.PRNGKey(0)
    kx, kp = jax.random.split(key)
    x = jax.random.normal(kx, (batch, state_dim), jnp.float32)
    params = init_dqn_params(kp, state_dim, action_dim, hidden_dim)

    # Pad + cast weights ONCE (would be re-run only after a parameter update).
    padded = prepare_dqn_params(params)

    fwd = jax.jit(lambda xx: dqn_forward(xx, padded, action_dim))
    out = jax.block_until_ready(fwd(x))

    ref = dqn_reference(x, params)
    assert out.shape == (batch, action_dim), out.shape
    assert jnp.allclose(out, ref, atol=1e-2, rtol=1e-2), "mismatch vs reference"

    print("KERNEL_OK")
</pallas_src>

<mosaic_0001>
module attributes {stable_mosaic.version = 11 : i64} {
  func.func @_dqn_kernel(%arg0: i32, %arg1: memref<16x32xbf16, #tpu.memory_space<vmem>>, %arg2: memref<32x128xbf16, #tpu.memory_space<vmem>>, %arg3: memref<1x128xf32, #tpu.memory_space<vmem>>, %arg4: memref<128x128xbf16, #tpu.memory_space<vmem>>, %arg5: memref<1x128xf32, #tpu.memory_space<vmem>>, %arg6: memref<128x128xbf16, #tpu.memory_space<vmem>>, %arg7: memref<1x128xf32, #tpu.memory_space<vmem>>, %arg8: memref<16x128xf32, #tpu.memory_space<vmem>>) attributes {dimension_semantics = [#tpu.dimension_semantics<parallel>], iteration_bounds = array<i64: 1>, scalar_prefetch = 0 : i64, scratch_operands = 0 : i64, tpu.core_type = #tpu.core_type<tc>, window_params = [{transform_indices = @transform_0, window_bounds = array<i64: 16, 32>}, {pipeline_mode = #tpu.pipeline_mode<synchronous>, transform_indices = @transform_1, window_bounds = array<i64: 32, 128>}, {pipeline_mode = #tpu.pipeline_mode<synchronous>, transform_indices = @transform_2, window_bounds = array<i64: 1, 128>}, {pipeline_mode = #tpu.pipeline_mode<synchronous>, transform_indices = @transform_3, window_bounds = array<i64: 128, 128>}, {pipeline_mode = #tpu.pipeline_mode<synchronous>, transform_indices = @transform_4, window_bounds = array<i64: 1, 128>}, {pipeline_mode = #tpu.pipeline_mode<synchronous>, transform_indices = @transform_5, window_bounds = array<i64: 128, 128>}, {pipeline_mode = #tpu.pipeline_mode<synchronous>, transform_indices = @transform_6, window_bounds = array<i64: 1, 128>}, {transform_indices = @transform_7, window_bounds = array<i64: 16, 128>}]} {
    %c0 = arith.constant 0 : index
    %c0_0 = arith.constant 0 : index
    %0 = vector.load %arg1[%c0, %c0_0] : memref<16x32xbf16, #tpu.memory_space<vmem>>, vector<16x32xbf16>
    %c0_1 = arith.constant 0 : index
    %c0_2 = arith.constant 0 : index
    %1 = vector.load %arg2[%c0_1, %c0_2] : memref<32x128xbf16, #tpu.memory_space<vmem>>, vector<32x128xbf16>
    %cst = arith.constant dense<0.000000e+00> : vector<16x128xf32>
    %2 = tpu.matmul %0, %1, %cst {dimension_numbers = #tpu.dot_dimension_numbers<[1], [0], [0], [1], [0, 0, 1, 1], [], []>} : vector<16x32xbf16>, vector<32x128xbf16>, vector<16x128xf32> -> vector<16x128xf32>
    %c0_3 = arith.constant 0 : index
    %c0_4 = arith.constant 0 : index
    %3 = vector.load %arg3[%c0_3, %c0_4] : memref<1x128xf32, #tpu.memory_space<vmem>>, vector<1x128xf32>
    %4 = vector.broadcast %3 : vector<1x128xf32> to vector<16x128xf32>
    %5 = arith.addf %2, %4 : vector<16x128xf32>
    %cst_5 = arith.constant 0.000000e+00 : f32
    %6 = vector.broadcast %cst_5 : f32 to vector<16x128xf32>
    %7 = arith.maximumf %5, %6 : vector<16x128xf32>
    %8 = arith.truncf %7 : vector<16x128xf32> to vector<16x128xbf16>
    %c0_6 = arith.constant 0 : index
    %c0_7 = arith.constant 0 : index
    %9 = vector.load %arg4[%c0_6, %c0_7] : memref<128x128xbf16, #tpu.memory_space<vmem>>, vector<128x128xbf16>
    %cst_8 = arith.constant dense<0.000000e+00> : vector<16x128xf32>
    %10 = tpu.matmul %8, %9, %cst_8 {dimension_numbers = #tpu.dot_dimension_numbers<[1], [0], [0], [1], [0, 0, 1, 1], [], []>} : vector<16x128xbf16>, vector<128x128xbf16>, vector<16x128xf32> -> vector<16x128xf32>
    %c0_9 = arith.constant 0 : index
    %c0_10 = arith.constant 0 : index
    %11 = vector.load %arg5[%c0_9, %c0_10] : memref<1x128xf32, #tpu.memory_space<vmem>>, vector<1x128xf32>
    %12 = vector.broadcast %11 : vector<1x128xf32> to vector<16x128xf32>
    %13 = arith.addf %10, %12 : vector<16x128xf32>
    %cst_11 = arith.constant 0.000000e+00 : f32
    %14 = vector.broadcast %cst_11 : f32 to vector<16x128xf32>
    %15 = arith.maximumf %13, %14 : vector<16x128xf32>
    %16 = arith.truncf %15 : vector<16x128xf32> to vector<16x128xbf16>
    %c0_12 = arith.constant 0 : index
    %c0_13 = arith.constant 0 : index
    %17 = vector.load %arg6[%c0_12, %c0_13] : memref<128x128xbf16, #tpu.memory_space<vmem>>, vector<128x128xbf16>
    %cst_14 = arith.constant dense<0.000000e+00> : vector<16x128xf32>
    %18 = tpu.matmul %16, %17, %cst_14 {dimension_numbers = #tpu.dot_dimension_numbers<[1], [0], [0], [1], [0, 0, 1, 1], [], []>} : vector<16x128xbf16>, vector<128x128xbf16>, vector<16x128xf32> -> vector<16x128xf32>
    %c0_15 = arith.constant 0 : index
    %c0_16 = arith.constant 0 : index
    %19 = vector.load %arg7[%c0_15, %c0_16] : memref<1x128xf32, #tpu.memory_space<vmem>>, vector<1x128xf32>
    %20 = vector.broadcast %19 : vector<1x128xf32> to vector<16x128xf32>
    %21 = arith.addf %18, %20 : vector<16x128xf32>
    %c0_17 = arith.constant 0 : index
    %c0_18 = arith.constant 0 : index
    %22 = vector.load %arg8[%c0_17, %c0_18] : memref<16x128xf32, #tpu.memory_space<vmem>>, vector<16x128xf32>
    tpu.vector_store %arg8[%c0_17, %c0_18], %21 {strides = array<i32>} : memref<16x128xf32, #tpu.memory_space<vmem>>, vector<16x128xf32>,
    return
  }
  func.func @transform_0(%arg0: i32) -> (i32, i32) {
    %c0_i32 = arith.constant 0 : i32
    %c0_i32_0 = arith.constant 0 : i32
    return %arg0, %c0_i32 : i32, i32
  }
  func.func @transform_1(%arg0: i32) -> (i32, i32) {
    %c0_i32 = arith.constant 0 : i32
    %c0_i32_0 = arith.constant 0 : i32
    %c0_i32_1 = arith.constant 0 : i32
    return %c0_i32, %c0_i32_0 : i32, i32
  }
  func.func @transform_2(%arg0: i32) -> (i32, i32) {
    %c0_i32 = arith.constant 0 : i32
    %c0_i32_0 = arith.constant 0 : i32
    %c0_i32_1 = arith.constant 0 : i32
    return %c0_i32, %c0_i32_0 : i32, i32
  }
  func.func @transform_3(%arg0: i32) -> (i32, i32) {
    %c0_i32 = arith.constant 0 : i32
    %c0_i32_0 = arith.constant 0 : i32
    %c0_i32_1 = arith.constant 0 : i32
    return %c0_i32, %c0_i32_0 : i32, i32
  }
  func.func @transform_4(%arg0: i32) -> (i32, i32) {
    %c0_i32 = arith.constant 0 : i32
    %c0_i32_0 = arith.constant 0 : i32
    %c0_i32_1 = arith.constant 0 : i32
    return %c0_i32, %c0_i32_0 : i32, i32
  }
  func.func @transform_5(%arg0: i32) -> (i32, i32) {
    %c0_i32 = arith.constant 0 : i32
    %c0_i32_0 = arith.constant 0 : i32
    %c0_i32_1 = arith.constant 0 : i32
    return %c0_i32, %c0_i32_0 : i32, i32
  }
  func.func @transform_6(%arg0: i32) -> (i32, i32) {
    %c0_i32 = arith.constant 0 : i32
    %c0_i32_0 = arith.constant 0 : i32
    %c0_i32_1 = arith.constant 0 : i32
    return %c0_i32, %c0_i32_0 : i32, i32
  }
  func.func @transform_7(%arg0: i32) -> (i32, i32) {
    %c0_i32 = arith.constant 0 : i32
    %c0_i32_0 = arith.constant 0 : i32
    return %arg0, %c0_i32 : i32, i32
  }
}

</mosaic_0001>

<llo_original>
// kernel: _lambda_.1
$region0: #{_lambda_.1}
  #allocation0 [shape = 'u32[]', space=smem, size = 0x4, offset = 0x4, fixed_abs, tag = 'smem constant byte address 0x4 - core index']
  #allocation1 [shape = 'u32[144,128]{1,0:T(1,128)}', space=vmem, size = 0x12000, scoped, tag = 'internal scratch']
  %s0 = inlined_call_operand.vmem [shape: bf16[16,32], index: 0, kind: input, shape index: {}]
  %s1 = inlined_call_operand.vmem [shape: bf16[32,128], index: 1, kind: input, shape index: {}]
  %s2 = inlined_call_operand.vmem [shape: f32[1,128], index: 2, kind: input, shape index: {}]
  %s3 = inlined_call_operand.hbm [shape: bf16[128,128], index: 3, kind: input, shape index: {}]
  %s4 = inlined_call_operand.vmem [shape: f32[1,128], index: 4, kind: input, shape index: {}]
  %s5 = inlined_call_operand.hbm [shape: bf16[128,128], index: 5, kind: input, shape index: {}]
  %s6 = inlined_call_operand.vmem [shape: f32[1,128], index: 6, kind: input, shape index: {}]
  %s7 = inlined_call_operand.vmem [shape: f32[16,128], index: 7, kind: output, shape index: {}]
  %s8 = sld [smem:[#allocation0]]
  $region46: #{_lambda_.1} parent=0
    _
  %s10 = ssub.s32 1, %s8
  %s11 = scalar_select 0, %s10, %s8
  $region1: #{_lambda_.1} parent=0
    #allocation2 [shape = 'u8[32768]{0}', space=vmem, size = 0x8000, scoped, tag = 'input window, operand 3, single buffered']
    #allocation3 [shape = 's32[1]{0}', space=sflag, size = 0x4, scoped, tag = 'scoped memory for _lambda_.1']
    #allocation4 [shape = 'u8[32768]{0}', space=vmem, size = 0x8000, scoped, tag = 'input window, operand 5, single buffered']
    #allocation5 [shape = 's32[1]{0}', space=sflag, size = 0x4, scoped, tag = 'scoped memory for _lambda_.1']
    %12 = vsyncpa [#allocation3], 0
    %13 = vsyncpa [#allocation5], 0
    // Predicated region
    $region2: #{_lambda_.1} parent=1 // pred_check
      _
    $region3: #{_lambda_.1} parent=1 // pred_check_branch
      %15 = sbr.rel (0) target = $region5
    $region4: #{_lambda_.1} parent=1 // pred_region
      _
    $region5: #{_lambda_.1} parent=1 // pred_fallthru
      _
    // Predicated region
    $region6: #{_lambda_.1} parent=1 // pred_check
      _
    $region7: #{_lambda_.1} parent=1 // pred_check_branch
      %17 = sbr.rel (0) target = $region9
    $region8: #{_lambda_.1} parent=1 // pred_region
      _
    $region9: #{_lambda_.1} parent=1 // pred_fallthru
      _
    // Predicated region
    $region10: #{_lambda_.1} parent=1 // pred_check
      _
    $region11: #{_lambda_.1} parent=1 // pred_check_branch
      %19 = sbr.rel (0) target = $region13
    $region12: #{_lambda_.1} parent=1 // pred_region
      _
    $region13: #{_lambda_.1} parent=1 // pred_fallthru
      _
    // Predicated region
    $region14: #{_lambda_.1} parent=1 // pred_check
      _
    $region15: #{_lambda_.1} parent=1 // pred_check_branch
      %21 = sbr.rel (0) target = $region17
    $region16: #{_lambda_.1} parent=1 // pred_region
      %s23 = ssub.s32 1024, 1024
      %24 = vsyncadd [#allocation3], %s23
      %s25 = sshll.u32 [#allocation2], 4
      %s26 = int_to_ptr.vmem [resolvable:$true] %s25
      %31 = dma.hbm_to_vmem [thread:$0]  %s3, 1024, %s26, [#allocation3], 64, 64, 4
    $region17: #{_lambda_.1} parent=1 // pred_fallthru
      _
    // Predicated region
    $region18: #{_lambda_.1} parent=1 // pred_check
      _
    $region19: #{_lambda_.1} parent=1 // pred_check_branch
      %33 = sbr.rel (0) target = $region21
    $region20: #{_lambda_.1} parent=1 // pred_region
      _
    $region21: #{_lambda_.1} parent=1 // pred_fallthru
      _
    // Predicated region
    $region22: #{_lambda_.1} parent=1 // pred_check
      _
    $region23: #{_lambda_.1} parent=1 // pred_check_branch
      %35 = sbr.rel (0) target = $region25
    $region24: #{_lambda_.1} parent=1 // pred_region
      %s37 = ssub.s32 1024, 1024
      %38 = vsyncadd [#allocation5], %s37
      %s39 = sshll.u32 [#allocation4], 4
      %s40 = int_to_ptr.vmem [resolvable:$true] %s39
      %45 = dma.hbm_to_vmem [thread:$0]  %s5, 1024, %s40, [#allocation5], 64, 64, 4
    $region25: #{_lambda_.1} parent=1 // pred_fallthru
      _
    // Predicated region
    $region26: #{_lambda_.1} parent=1 // pred_check
      _
    $region27: #{_lambda_.1} parent=1 // pred_check_branch
      %47 = sbr.rel (0) target = $region29
    $region28: #{_lambda_.1} parent=1 // pred_region
      _
    $region29: #{_lambda_.1} parent=1 // pred_fallthru
      _
    // Predicated region
    $region30: #{_lambda_.1} parent=1 // pred_check
      _
    $region31: #{_lambda_.1} parent=1 // pred_check_branch
      %49 = sbr.rel (0) target = $region33
    $region32: #{_lambda_.1} parent=1 // pred_region
      %50 = dma.done [#allocation3], 1024
    $region33: #{_lambda_.1} parent=1 // pred_fallthru
      _
    // Predicated region
    $region34: #{_lambda_.1} parent=1 // pred_check
      _
    $region35: #{_lambda_.1} parent=1 // pred_check_branch
      %52 = sbr.rel (0) target = $region37
    $region36: #{_lambda_.1} parent=1 // pred_region
      %53 = dma.done [#allocation5], 1024
    $region37: #{_lambda_.1} parent=1 // pred_fallthru
      _
    %v55 = vld [vmem:[%s0] sm:$0xf]
    %v56 = vld [vmem:[%s0 + $0x4] sm:$0xf]
    %v57 = vld [vmem:[%s1] sm:$0xf]
    %v58 = vld [vmem:[%s1 + $0x4] sm:$0xf]
    %v59 = vld [vmem:[%s1 + $0x8] sm:$0xf]
    %v60 = vld [vmem:[%s1 + $0xc] sm:$0xf]
    %v61 = vld [vmem:[%s2] sm:$0x1]
    %v63 = vlaneseq
    %v64 = vshrl.u32 %v63, 7
    %v65 = vsub.s32 0, %v64
    %v66 = vrot.slane %v61, %v65
    %v70 = vunpack.c.l.b16 %v55
    %v71 = vunpack.c.l.b16 %v56
    %v72 = vpack.c.b16 %v71, %v70
    %v77 = vunpack.c.l.b16 %v57
    %v78 = vunpack.c.l.b16 %v58
    %v79 = vunpack.c.l.b16 %v59
    %v80 = vunpack.c.l.b16 %v60
    %v81 = vpack.c.b16 %v78, %v77
    %v82 = vpack.c.b16 %v80, %v79
    %vm85 = vcmask 261120
    %v87 = vsel %vm85, %v72, 0
    %89 = vmatprep.subr.bf16.mxu0 0
    %90 = vmatpush1.bf16.msra.mxu0 0
    %91 = vmatprep.subr.bf16.mxu0 0
    %92 = vmatpush1.bf16.msra.mxu0 0
    %93 = vmatprep.subr.bf16.mxu0 0
    %94 = vmatpush1.bf16.msra.mxu0 0
    %95 = vmatprep.subr.bf16.mxu0 0
    %96 = vmatpush1.bf16.msra.mxu0 0
    %97 = vmatprep.subr.bf16.mxu0 0
    %98 = vmatpush1.bf16.msra.mxu0 0
    %99 = vmatprep.subr.bf16.mxu0 0
    %100 = vmatpush1.bf16.msra.mxu0 0
    %101 = vmatprep.subr.bf16.mxu0 0
    %102 = vmatpush1.bf16.msra.mxu0 %v82
    %103 = vmatprep.subr.bf16.mxu0 0
    %104 = vmatpush1.bf16.msra.mxu0 %v81
    %105 = vmatprep.subr.bf16.mxu0 0
    %106 = vmatpush2.bf16.msra.mxu0 0
    %107 = vmatprep.subr.bf16.mxu0 0
    %108 = vmatpush2.bf16.msra.mxu0 0
    %109 = vmatprep.subr.bf16.mxu0 0
    %110 = vmatpush2.bf16.msra.mxu0 0
    %111 = vmatprep.subr.bf16.mxu0 0
    %112 = vmatpush2.bf16.msra.mxu0 0
    %113 = vmatprep.subr.bf16.mxu0 0
    %114 = vmatpush2.bf16.msra.mxu0 0
    %115 = vmatprep.subr.bf16.mxu0 0
    %116 = vmatpush2.bf16.msra.mxu0 0
    %117 = vmatprep.subr.bf16.mxu0 0
    %118 = vmatpush2.bf16.msra.mxu0 0
    %119 = vmatprep.subr.bf16.mxu0 0
    %120 = vmatpush2.bf16.msra.mxu0 0
    %121 = vmatprep.mubr.bf16.mxu0 0
    %122 = vmatmul.mubr.bf16.gmra.mxu0 %v87
    %v123 = vpop.f32.mrf.mxu0
    %v124 = vadd.f32 %v66, %v123
    %v125 = vpop.f32.mrf.mxu0
    %v126 = vpop.f32.mrf.mxu0
    %v127 = vadd.f32 %v66, %v126
    %v128 = vpop.f32.mrf.mxu0
    %129 = vdwg.mxu0
    %v130 = vmax.f32 %v124, 0.0
    %v131 = vmax.f32 %v127, 0.0
    %v132 = vpack.c.bf16 %v131, %v130
    %v133 = vld [vmem:[#allocation2] sm:$0xf]
    %v134 = vld [vmem:[#allocation2 + $0x4] sm:$0xf]
    %v135 = vld [vmem:[#allocation2 + $0x8] sm:$0xf]
    %v136 = vld [vmem:[#allocation2 + $0xc] sm:$0xf]
    %v137 = vld [vmem:[#allocation2 + $0x10] sm:$0xf]
    %v138 = vld [vmem:[#allocation2 + $0x14] sm:$0xf]
    %v139 = vld [vmem:[#allocation2 + $0x18] sm:$0xf]
    %v140 = vld [vmem:[#allocation2 + $0x1c] sm:$0xf]
    %v141 = vld [vmem:[#allocation2 + $0x20] sm:$0xf]
    %v142 = vld [vmem:[#allocation2 + $0x24] sm:$0xf]
    %v143 = vld [vmem:[#allocation2 + $0x28] sm:$0xf]
    %v144 = vld [vmem:[#allocation2 + $0x2c] sm:$0xf]
    %v145 = vld [vmem:[#allocation2 + $0x30] sm:$0xf]
    %v146 = vld [vmem:[#allocation2 + $0x34] sm:$0xf]
    %v147 = vld [vmem:[#allocation2 + $0x38] sm:$0xf]
    %v148 = vld [vmem:[#allocation2 + $0x3c] sm:$0xf]
    %v149 = vld [vmem:[%s4] sm:$0x1]
    %v151 = vlaneseq
    %v152 = vshrl.u32 %v151, 7
    %v153 = vsub.s32 0, %v152
    %v154 = vrot.slane %v149, %v153
    %v172 = vunpack.c.l.b16 %v133
    %v173 = vunpack.c.l.b16 %v134
    %v174 = vunpack.c.l.b16 %v135
    %v175 = vunpack.c.l.b16 %v136
    %v176 = vunpack.c.l.b16 %v137
    %v177 = vunpack.c.l.b16 %v138
    %v178 = vunpack.c.l.b16 %v139
    %v179 = vunpack.c.l.b16 %v140
    %v180 = vunpack.c.l.b16 %v141
    %v181 = vunpack.c.l.b16 %v142
    %v182 = vunpack.c.l.b16 %v143
    %v183 = vunpack.c.l.b16 %v144
    %v184 = vunpack.c.l.b16 %v145
    %v185 = vunpack.c.l.b16 %v146
    %v186 = vunpack.c.l.b16 %v147
    %v187 = vunpack.c.l.b16 %v148
    %v188 = vpack.c.b16 %v173, %v172
    %v189 = vpack.c.b16 %v175, %v174
    %v190 = vpack.c.b16 %v177, %v176
    %v191 = vpack.c.b16 %v179, %v178
    %v192 = vpack.c.b16 %v181, %v180
    %v193 = vpack.c.b16 %v183, %v182
    %v194 = vpack.c.b16 %v185, %v184
    %v195 = vpack.c.b16 %v187, %v186
    %204 = vmatprep.subr.bf16.mxu0 0
    %205 = vmatpush1.bf16.msra.mxu0 %v195
    %206 = vmatprep.subr.bf16.mxu0 0
    %207 = vmatpush1.bf16.msra.mxu0 %v194
    %208 = vmatprep.subr.bf16.mxu0 0
    %209 = vmatpush1.bf16.msra.mxu0 %v193
    %210 = vmatprep.subr.bf16.mxu0 0
    %211 = vmatpush1.bf16.msra.mxu0 %v192
    %212 = vmatprep.subr.bf16.mxu0 0
    %213 = vmatpush1.bf16.msra.mxu0 %v191
    %214 = vmatprep.subr.bf16.mxu0 0
    %215 = vmatpush1.bf16.msra.mxu0 %v190
    %216 = vmatprep.subr.bf16.mxu0 0
    %217 = vmatpush1.bf16.msra.mxu0 %v189
    %218 = vmatprep.subr.bf16.mxu0 0
    %219 = vmatpush1.bf16.msra.mxu0 %v188
    %220 = vmatprep.subr.bf16.mxu0 0
    %221 = vmatpush2.bf16.msra.mxu0 0
    %222 = vmatprep.subr.bf16.mxu0 0
    %223 = vmatpush2.bf16.msra.mxu0 0
    %224 = vmatprep.subr.bf16.mxu0 0
    %225 = vmatpush2.bf16.msra.mxu0 0
    %226 = vmatprep.subr.bf16.mxu0 0
    %227 = vmatpush2.bf16.msra.mxu0 0
    %228 = vmatprep.subr.bf16.mxu0 0
    %229 = vmatpush2.bf16.msra.mxu0 0
    %230 = vmatprep.subr.bf16.mxu0 0
    %231 = vmatpush2.bf16.msra.mxu0 0
    %232 = vmatprep.subr.bf16.mxu0 0
    %233 = vmatpush2.bf16.msra.mxu0 0
    %234 = vmatprep.subr.bf16.mxu0 0
    %235 = vmatpush2.bf16.msra.mxu0 0
    %236 = vmatprep.mubr.bf16.mxu0 0
    %237 = vmatmul.mubr.bf16.gmra.mxu0 %v132
    %v238 = vpop.f32.mrf.mxu0
    %v239 = vadd.f32 %v154, %v238
    %v240 = vpop.f32.mrf.mxu0
    %v241 = vpop.f32.mrf.mxu0
    %v242 = vadd.f32 %v154, %v241
    %v243 = vpop.f32.mrf.mxu0
    %244 = vdwg.mxu0
    %v245 = vmax.f32 %v239, 0.0
    %v246 = vmax.f32 %v242, 0.0
    %v247 = vpack.c.bf16 %v246, %v245
    %v248 = vld [vmem:[#allocation4] sm:$0xf]
    %v249 = vld [vmem:[#allocation4 + $0x4] sm:$0xf]
    %v250 = vld [vmem:[#allocation4 + $0x8] sm:$0xf]
    %v251 = vld [vmem:[#allocation4 + $0xc] sm:$0xf]
    %v252 = vld [vmem:[#allocation4 + $0x10] sm:$0xf]
    %v253 = vld [vmem:[#allocation4 + $0x14] sm:$0xf]
    %v254 = vld [vmem:[#allocation4 + $0x18] sm:$0xf]
    %v255 = vld [vmem:[#allocation4 + $0x1c] sm:$0xf]
    %v256 = vld [vmem:[#allocation4 + $0x20] sm:$0xf]
    %v257 = vld [vmem:[#allocation4 + $0x24] sm:$0xf]
    %v258 = vld [vmem:[#allocation4 + $0x28] sm:$0xf]
    %v259 = vld [vmem:[#allocation4 + $0x2c] sm:$0xf]
    %v260 = vld [vmem:[#allocation4 + $0x30] sm:$0xf]
    %v261 = vld [vmem:[#allocation4 + $0x34] sm:$0xf]
    %v262 = vld [vmem:[#allocation4 + $0x38] sm:$0xf]
    %v263 = vld [vmem:[#allocation4 + $0x3c] sm:$0xf]
    %v264 = vld [vmem:[%s6] sm:$0x1]
    %v266 = vlaneseq
    %v267 = vshrl.u32 %v266, 7
    %v268 = vsub.s32 0, %v267
    %v269 = vrot.slane %v264, %v268
    %v287 = vunpack.c.l.b16 %v248
    %v288 = vunpack.c.l.b16 %v249
    %v289 = vunpack.c.l.b16 %v250
    %v290 = vunpack.c.l.b16 %v251
    %v291 = vunpack.c.l.b16 %v252
    %v292 = vunpack.c.l.b16 %v253
    %v293 = vunpack.c.l.b16 %v254
    %v294 = vunpack.c.l.b16 %v255
    %v295 = vunpack.c.l.b16 %v256
    %v296 = vunpack.c.l.b16 %v257
    %v297 = vunpack.c.l.b16 %v258
    %v298 = vunpack.c.l.b16 %v259
    %v299 = vunpack.c.l.b16 %v260
    %v300 = vunpack.c.l.b16 %v261
    %v301 = vunpack.c.l.b16 %v262
    %v302 = vunpack.c.l.b16 %v263
    %v303 = vpack.c.b16 %v288, %v287
    %v304 = vpack.c.b16 %v290, %v289
    %v305 = vpack.c.b16 %v292, %v291
    %v306 = vpack.c.b16 %v294, %v293
    %v307 = vpack.c.b16 %v296, %v295
    %v308 = vpack.c.b16 %v298, %v297
    %v309 = vpack.c.b16 %v300, %v299
    %v310 = vpack.c.b16 %v302, %v301
    %319 = vmatprep.subr.bf16.mxu0 0
    %320 = vmatpush1.bf16.msra.mxu0 %v310
    %321 = vmatprep.subr.bf16.mxu0 0
    %322 = vmatpush1.bf16.msra.mxu0 %v309
    %323 = vmatprep.subr.bf16.mxu0 0
    %324 = vmatpush1.bf16.msra.mxu0 %v308
    %325 = vmatprep.subr.bf16.mxu0 0
    %326 = vmatpush1.bf16.msra.mxu0 %v307
    %327 = vmatprep.subr.bf16.mxu0 0
    %328 = vmatpush1.bf16.msra.mxu0 %v306
    %329 = vmatprep.subr.bf16.mxu0 0
    %330 = vmatpush1.bf16.msra.mxu0 %v305
    %331 = vmatprep.subr.bf16.mxu0 0
    %332 = vmatpush1.bf16.msra.mxu0 %v304
    %333 = vmatprep.subr.bf16.mxu0 0
    %334 = vmatpush1.bf16.msra.mxu0 %v303
    %335 = vmatprep.subr.bf16.mxu0 0
    %336 = vmatpush2.bf16.msra.mxu0 0
    %337 = vmatprep.subr.bf16.mxu0 0
    %338 = vmatpush2.bf16.msra.mxu0 0
    %339 = vmatprep.subr.bf16.mxu0 0
    %340 = vmatpush2.bf16.msra.mxu0 0
    %341 = vmatprep.subr.bf16.mxu0 0
    %342 = vmatpush2.bf16.msra.mxu0 0
    %343 = vmatprep.subr.bf16.mxu0 0
    %344 = vmatpush2.bf16.msra.mxu0 0
    %345 = vmatprep.subr.bf16.mxu0 0
    %346 = vmatpush2.bf16.msra.mxu0 0
    %347 = vmatprep.subr.bf16.mxu0 0
    %348 = vmatpush2.bf16.msra.mxu0 0
    %349 = vmatprep.subr.bf16.mxu0 0
    %350 = vmatpush2.bf16.msra.mxu0 0
    %351 = vmatprep.mubr.bf16.mxu0 0
    %352 = vmatmul.mubr.bf16.gmra.mxu0 %v247
    %v353 = vpop.f32.mrf.mxu0
    %v354 = vadd.f32 %v269, %v353
    %v355 = vpop.f32.mrf.mxu0
    %v356 = vpop.f32.mrf.mxu0
    %v357 = vadd.f32 %v269, %v356
    %v358 = vpop.f32.mrf.mxu0
    %359 = vdwg.mxu0
    %360 = vst [vmem:[%s7] sm:$0xff] %v354
    %361 = vst [vmem:[%s7 + $0x8] sm:$0xff] %v357
    // Predicated region
    $region38: #{_lambda_.1} parent=1 // pred_check
      _
    $region39: #{_lambda_.1} parent=1 // pred_check_branch
      %363 = sbr.rel (0) target = $region41
    $region40: #{_lambda_.1} parent=1 // pred_region
      _
    $region41: #{_lambda_.1} parent=1 // pred_fallthru
      _
    // Predicated region
    $region42: #{_lambda_.1} parent=1 // pred_check
      _
    $region43: #{_lambda_.1} parent=1 // pred_check_branch
      %365 = sbr.rel (0) target = $region45
    $region44: #{_lambda_.1} parent=1 // pred_region
      _
    $region45: #{_lambda_.1} parent=1 // pred_fallthru
      _
    %366 = vsyncpa [#allocation3], 1
    %367 = vsyncpa [#allocation5], 1

</llo_original>
